<compile_context>
chip_gen: v7x
topology: tpu7x:2x2x1
jax: 0.10.0
libtpu: 0.0.40
codegen_flags: <defaults>
</compile_context>

<pallas_src>
from typing import NamedTuple, Optional

import jax
import jax.numpy as jnp
from jax.experimental import pallas as pl
from jax.experimental.pallas import tpu as pltpu


class EmbedReturn(NamedTuple):
    emb: Optional[jax.Array] = None
    time_emb: Optional[jax.Array] = None
    style: Optional[jax.Array] = None


def _time_embed_kernel(x_ref, w1_ref, b1_ref, w2_ref, b2_ref, o_ref):
    # x: [B, Tc], w1: [Tc, D], b1: [1, D], w2: [D, D], b2: [1, D], o: [B, D]
    # Linear 1 on the MXU: native-dtype operands, f32 accumulation.
    h = jnp.dot(x_ref[...], w1_ref[...], preferred_element_type=jnp.float32)
    h = h + b1_ref[...].astype(jnp.float32)          # broadcast bias add (VPU)
    # SiLU in f32: EUP sigmoid + VPU multiply, directly on the accumulator.
    h = h * jax.nn.sigmoid(h)
    # Linear 2 on the MXU: cast activation to the weight dtype (no-op for f32),
    # accumulate in f32, add bias in f32, single downcast on store.
    out = jnp.dot(h.astype(w2_ref.dtype), w2_ref[...],
                  preferred_element_type=jnp.float32)
    out = out + b2_ref[...].astype(jnp.float32)
    o_ref[...] = out.astype(o_ref.dtype)


def time_embed_pallas(time_emb, w1, b1, w2, b2):
    """time_embed MLP: Linear -> SiLU -> Linear as one gridless Pallas call."""
    B, _ = time_emb.shape
    D = w1.shape[1]
    vmem_spec = pl.BlockSpec(memory_space=pltpu.MemorySpace.VMEM)
    # Problem is tiny (~KFLOPs, ~tens of KB): no grid, no pipeline machinery,
    # every operand lives in VMEM as a single whole-array block.
    # TODO(synk): at these sizes a standalone custom call is launch-bound;
    # fuse into the consuming UNet block (weights resident) if end-to-end
    # latency matters.
    return pl.pallas_call(
        _time_embed_kernel,
        out_shape=jax.ShapeDtypeStruct((B, D), time_emb.dtype),
        in_specs=[vmem_spec, vmem_spec, vmem_spec, vmem_spec, vmem_spec],
        out_specs=vmem_spec,
    )(time_emb, w1, b1, w2, b2)


def time_style_seperate_embed(params, time_emb=None, cond=None):
    """Mirror of TimeStyleSeperateEmbed.forward."""
    if time_emb is None:
        te = None
    else:
        te = time_embed_pallas(
            time_emb, params["w1"], params["b1"], params["w2"], params["b2"]
        )
    style = cond  # nn.Identity()
    return EmbedReturn(emb=style, time_emb=te, style=style)


def init_params(key, time_channels, time_out_channels, dtype=jnp.float32):
    k1, k2, k3, k4 = jax.random.split(key, 4)
    # Deterministic synthetic initialization (Kaiming-uniform-ish scale).
    s1 = 1.0 / jnp.sqrt(time_channels)
    s2 = 1.0 / jnp.sqrt(time_out_channels)
    return {
        "w1": jax.random.uniform(k1, (time_channels, time_out_channels),
                                 minval=-s1, maxval=s1).astype(dtype),
        "b1": jax.random.uniform(k2, (1, time_out_channels),
                                 minval=-s1, maxval=s1).astype(dtype),
        "w2": jax.random.uniform(k3, (time_out_channels, time_out_channels),
                                 minval=-s2, maxval=s2).astype(dtype),
        "b2": jax.random.uniform(k4, (1, time_out_channels),
                                 minval=-s2, maxval=s2).astype(dtype),
    }


if __name__ == "__main__":
    key = jax.random.PRNGKey(0)
    kp, kt, kc = jax.random.split(key, 3)

    B = 2
    time_channels = 32
    time_out_channels = 64

    params = init_params(kp, time_channels, time_out_channels)

    time_emb = jax.random.normal(kt, (B, time_channels), dtype=jnp.float32)
    # cond (style) is an identity pass-through; use a conv-style feature map.
    cond = jax.random.normal(kc, (B, 4, 16, 16), dtype=jnp.float32)

    out = time_style_seperate_embed(params, time_emb=time_emb, cond=cond)
    jax.block_until_ready(out.time_emb)
    jax.block_until_ready(out.style)

    # Pure-JAX reference for correctness.
    h = time_emb @ params["w1"] + params["b1"]
    h = h * jax.nn.sigmoid(h)
    ref = h @ params["w2"] + params["b2"]
    assert out.time_emb.shape == (B, time_out_channels)
    assert jnp.allclose(out.time_emb, ref, atol=1e-5, rtol=1e-5)
    assert out.emb is out.style
    assert jnp.array_equal(out.style, cond)

    # Exercise the time_emb=None branch (mirrors the PyTorch module).
    out_none = time_style_seperate_embed(params, time_emb=None, cond=cond)
    assert out_none.time_emb is None
    assert jnp.array_equal(out_none.style, cond)

    print("KERNEL_OK")
</pallas_src>

<mosaic_0001>
module attributes {stable_mosaic.version = 11 : i64} {
  func.func @_time_embed_kernel(%arg0: memref<2x32xf32, #tpu.memory_space<vmem>>, %arg1: memref<32x64xf32, #tpu.memory_space<vmem>>, %arg2: memref<1x64xf32, #tpu.memory_space<vmem>>, %arg3: memref<64x64xf32, #tpu.memory_space<vmem>>, %arg4: memref<1x64xf32, #tpu.memory_space<vmem>>, %arg5: memref<2x64xf32, #tpu.memory_space<vmem>>) attributes {dimension_semantics = [], scalar_prefetch = 0 : i64, scratch_operands = 0 : i64, tpu.core_type = #tpu.core_type<tc>} {
    %c0 = arith.constant 0 : index
    %c0_0 = arith.constant 0 : index
    %0 = vector.load %arg0[%c0, %c0_0] : memref<2x32xf32, #tpu.memory_space<vmem>>, vector<2x32xf32>
    %c0_1 = arith.constant 0 : index
    %c0_2 = arith.constant 0 : index
    %1 = vector.load %arg1[%c0_1, %c0_2] : memref<32x64xf32, #tpu.memory_space<vmem>>, vector<32x64xf32>
    %cst = arith.constant dense<0.000000e+00> : vector<2x64xf32>
    %2 = tpu.matmul %0, %1, %cst {dimension_numbers = #tpu.dot_dimension_numbers<[1], [0], [0], [1], [0, 0, 1, 1], [], []>} : vector<2x32xf32>, vector<32x64xf32>, vector<2x64xf32> -> vector<2x64xf32>
    %c0_3 = arith.constant 0 : index
    %c0_4 = arith.constant 0 : index
    %3 = vector.load %arg2[%c0_3, %c0_4] : memref<1x64xf32, #tpu.memory_space<vmem>>, vector<1x64xf32>
    %4 = vector.broadcast %3 : vector<1x64xf32> to vector<2x64xf32>
    %5 = arith.addf %2, %4 : vector<2x64xf32>
    %6 = arith.negf %5 : vector<2x64xf32>
    %7 = math.exp %6 : vector<2x64xf32>
    %cst_5 = arith.constant 1.000000e+00 : f32
    %8 = vector.broadcast %cst_5 : f32 to vector<2x64xf32>
    %9 = arith.addf %8, %7 : vector<2x64xf32>
    %10 = arith.divf %8, %9 : vector<2x64xf32>
    %11 = arith.mulf %5, %10 : vector<2x64xf32>
    %c0_6 = arith.constant 0 : index
    %c0_7 = arith.constant 0 : index
    %12 = vector.load %arg3[%c0_6, %c0_7] : memref<64x64xf32, #tpu.memory_space<vmem>>, vector<64x64xf32>
    %cst_8 = arith.constant dense<0.000000e+00> : vector<2x64xf32>
    %13 = tpu.matmul %11, %12, %cst_8 {dimension_numbers = #tpu.dot_dimension_numbers<[1], [0], [0], [1], [0, 0, 1, 1], [], []>} : vector<2x64xf32>, vector<64x64xf32>, vector<2x64xf32> -> vector<2x64xf32>
    %c0_9 = arith.constant 0 : index
    %c0_10 = arith.constant 0 : index
    %14 = vector.load %arg4[%c0_9, %c0_10] : memref<1x64xf32, #tpu.memory_space<vmem>>, vector<1x64xf32>
    %15 = vector.broadcast %14 : vector<1x64xf32> to vector<2x64xf32>
    %16 = arith.addf %13, %15 : vector<2x64xf32>
    %c0_11 = arith.constant 0 : index
    %c0_12 = arith.constant 0 : index
    %17 = vector.load %arg5[%c0_11, %c0_12] : memref<2x64xf32, #tpu.memory_space<vmem>>, vector<2x64xf32>
    tpu.vector_store %arg5[%c0_11, %c0_12], %16 {strides = array<i32>} : memref<2x64xf32, #tpu.memory_space<vmem>>, vector<2x64xf32>,
    return
  }
}

</mosaic_0001>

<llo_original>
// kernel: tpu_custom_call.1
$region0: #{tpu_custom_call.1}
  #allocation0 [shape = 'u32[]', space=smem, size = 0x4, offset = 0x4, fixed_abs, tag = 'smem constant byte address 0x4 - core index']
  #allocation1 [shape = 'u32[144,128]{1,0:T(1,128)}', space=vmem, size = 0x12000, scoped, tag = 'internal scratch']
  %s0 = inlined_call_operand.hbm [shape: f32[2,32], index: 0, kind: input, shape index: {}]
  %s1 = inlined_call_operand.hbm [shape: f32[32,64], index: 1, kind: input, shape index: {}]
  %s2 = inlined_call_operand.vmem [shape: f32[1,64], index: 2, kind: input, shape index: {}]
  %s3 = inlined_call_operand.hbm [shape: f32[64,64], index: 3, kind: input, shape index: {}]
  %s4 = inlined_call_operand.vmem [shape: f32[1,64], index: 4, kind: input, shape index: {}]
  %s5 = inlined_call_operand.hbm [shape: f32[2,64], index: 5, kind: output, shape index: {}]
  %s6 = sld [smem:[#allocation0]]
  $region42: #{tpu_custom_call.1} parent=0
    _
  %s8 = ssub.s32 1, %s6
  %s9 = scalar_select 0, %s8, %s6
  $region1: #{tpu_custom_call.1} parent=0
    #allocation2 [shape = 'u8[1024]{0}', space=vmem, size = 0x400, scoped, tag = 'input window, operand 0, single buffered']
    #allocation3 [shape = 's32[1]{0}', space=sflag, size = 0x4, scoped, tag = 'scoped memory for tpu_custom_call.1']
    #allocation4 [shape = 's32[1]{0}', space=sflag, size = 0x4, scoped, tag = 'scoped memory for tpu_custom_call.1']
    #allocation5 [shape = 'u8[16384]{0}', space=vmem, size = 0x4000, scoped, tag = 'input window, operand 1, single buffered']
    #allocation6 [shape = 's32[1]{0}', space=sflag, size = 0x4, scoped, tag = 'scoped memory for tpu_custom_call.1']
    #allocation7 [shape = 'u8[32768]{0}', space=vmem, size = 0x8000, scoped, tag = 'input window, operand 3, single buffered']
    #allocation8 [shape = 'u8[1024]{0}', space=vmem, size = 0x400, scoped, tag = 'output window, operand 0, single buffered']
    %10 = vsyncpa [#allocation3], 0
    %11 = vsyncpa [#allocation6], 0
    %12 = vsyncpa [#allocation4], 0
    // Predicated region
    $region2: #{tpu_custom_call.1} parent=1 // pred_check
      _
    $region3: #{tpu_custom_call.1} parent=1 // pred_check_branch
      %14 = sbr.rel (0) target = $region5
    $region4: #{tpu_custom_call.1} parent=1 // pred_region
      %s16 = ssub.s32 32, 32
      %17 = vsyncadd [#allocation3], %s16
      %s19 = sshll.u32 [#allocation2], 4
      %s20 = int_to_ptr.vmem [resolvable:$true] %s19
      %22 = dma.hbm_to_vmem [thread:$0]  %s0, 32, %s20, [#allocation3]
    $region5: #{tpu_custom_call.1} parent=1 // pred_fallthru
      _
    // Predicated region
    $region6: #{tpu_custom_call.1} parent=1 // pred_check
      _
    $region7: #{tpu_custom_call.1} parent=1 // pred_check_branch
      %24 = sbr.rel (0) target = $region9
    $region8: #{tpu_custom_call.1} parent=1 // pred_region
      %s26 = ssub.s32 512, 512
      %27 = vsyncadd [#allocation6], %s26
      %s28 = sshll.u32 [#allocation5], 4
      %s29 = int_to_ptr.vmem [resolvable:$true] %s28
      %34 = dma.hbm_to_vmem [thread:$0]  %s1, 512, %s29, [#allocation6], 128, 128, 8
    $region9: #{tpu_custom_call.1} parent=1 // pred_fallthru
      _
    // Predicated region
    $region10: #{tpu_custom_call.1} parent=1 // pred_check
      _
    $region11: #{tpu_custom_call.1} parent=1 // pred_check_branch
      %36 = sbr.rel (0) target = $region13
    $region12: #{tpu_custom_call.1} parent=1 // pred_region
      _
    $region13: #{tpu_custom_call.1} parent=1 // pred_fallthru
      _
    // Predicated region
    $region14: #{tpu_custom_call.1} parent=1 // pred_check
      _
    $region15: #{tpu_custom_call.1} parent=1 // pred_check_branch
      %38 = sbr.rel (0) target = $region17
    $region16: #{tpu_custom_call.1} parent=1 // pred_region
      %s40 = ssub.s32 1024, 1024
      %41 = vsyncadd [#allocation6], %s40
      %s42 = sshll.u32 [#allocation7], 4
      %s43 = int_to_ptr.vmem [resolvable:$true] %s42
      %48 = dma.hbm_to_vmem [thread:$0]  %s3, 1024, %s43, [#allocation6], 128, 128, 8
    $region17: #{tpu_custom_call.1} parent=1 // pred_fallthru
      _
    // Predicated region
    $region18: #{tpu_custom_call.1} parent=1 // pred_check
      _
    $region19: #{tpu_custom_call.1} parent=1 // pred_check_branch
      %50 = sbr.rel (0) target = $region21
    $region20: #{tpu_custom_call.1} parent=1 // pred_region
      _
    $region21: #{tpu_custom_call.1} parent=1 // pred_fallthru
      _
    // Predicated region
    $region22: #{tpu_custom_call.1} parent=1 // pred_check
      _
    $region23: #{tpu_custom_call.1} parent=1 // pred_check_branch
      %52 = sbr.rel (0) target = $region25
    $region24: #{tpu_custom_call.1} parent=1 // pred_region
      %53 = dma.done [#allocation3], 32
    $region25: #{tpu_custom_call.1} parent=1 // pred_fallthru
      _
    // Predicated region
    $region26: #{tpu_custom_call.1} parent=1 // pred_check
      _
    $region27: #{tpu_custom_call.1} parent=1 // pred_check_branch
      %55 = sbr.rel (0) target = $region29
    $region28: #{tpu_custom_call.1} parent=1 // pred_region
      %56 = dma.done [#allocation6], 512
    $region29: #{tpu_custom_call.1} parent=1 // pred_fallthru
      _
    // Predicated region
    $region30: #{tpu_custom_call.1} parent=1 // pred_check
      _
    $region31: #{tpu_custom_call.1} parent=1 // pred_check_branch
      %58 = sbr.rel (0) target = $region33
    $region32: #{tpu_custom_call.1} parent=1 // pred_region
      %59 = dma.done [#allocation6], 1024
    $region33: #{tpu_custom_call.1} parent=1 // pred_fallthru
      _
    %v60 = vld [vmem:[#allocation2] sm:$0x3]
    %v61 = vld [vmem:[#allocation5] sm:$0xff]
    %v62 = vld [vmem:[#allocation5 + $0x8] sm:$0xff]
    %v63 = vld [vmem:[#allocation5 + $0x10] sm:$0xff]
    %v64 = vld [vmem:[#allocation5 + $0x18] sm:$0xff]
    %v65 = vld [vmem:[%s2] sm:$0x1]
    %v67 = vlaneseq
    %v68 = vshrl.u32 %v67, 7
    %v69 = vsub.s32 0, %v68
    %v70 = vrot.slane %v65, %v69
    %vm72 = vcmask 261120
    %v74 = vsel %vm72, %v60, 0
    %76 = vmatprep.subr.mxu0 0.0
    %77 = vmatpush1.msra.mxu0 %v61
    %78 = vmatprep.subr.mxu0 0.0
    %79 = vmatpush1.msra.mxu0 %v62
    %80 = vmatprep.subr.mxu0 0.0
    %81 = vmatpush1.msra.mxu0 %v63
    %82 = vmatprep.subr.mxu0 0.0
    %83 = vmatpush1.msra.mxu0 %v64
    %84 = vmatprep.subr.mxu0 0.0
    %85 = vmatpush1.msra.mxu0 0.0
    %86 = vmatprep.subr.mxu0 0.0
    %87 = vmatpush1.msra.mxu0 0.0
    %88 = vmatprep.subr.mxu0 0.0
    %89 = vmatpush1.msra.mxu0 0.0
    %90 = vmatprep.subr.mxu0 0.0
    %91 = vmatpush1.msra.mxu0 0.0
    %92 = vmatprep.subr.mxu0 0.0
    %93 = vmatpush1.msra.mxu0 0.0
    %94 = vmatprep.subr.mxu0 0.0
    %95 = vmatpush1.msra.mxu0 0.0
    %96 = vmatprep.subr.mxu0 0.0
    %97 = vmatpush1.msra.mxu0 0.0
    %98 = vmatprep.subr.mxu0 0.0
    %99 = vmatpush1.msra.mxu0 0.0
    %100 = vmatprep.subr.mxu0 0.0
    %101 = vmatpush1.msra.mxu0 0.0
    %102 = vmatprep.subr.mxu0 0.0
    %103 = vmatpush1.msra.mxu0 0.0
    %104 = vmatprep.subr.mxu0 0.0
    %105 = vmatpush1.msra.mxu0 0.0
    %106 = vmatprep.subr.mxu0 0.0
    %107 = vmatpush1.msra.mxu0 0.0
    %108 = vmatprep.subr.mxu0 0.0
    %109 = vmatpush1.msra.mxu0 0.0
    %110 = vmatprep.subr.mxu0 0.0
    %111 = vmatpush1.msra.mxu0 0.0
    %112 = vmatprep.subr.mxu0 0.0
    %113 = vmatpush1.msra.mxu0 0.0
    %114 = vmatprep.subr.mxu0 0.0
    %115 = vmatpush1.msra.mxu0 0.0
    %116 = vmatprep.subr.mxu0 0.0
    %117 = vmatpush1.msra.mxu0 0.0
    %118 = vmatprep.subr.mxu0 0.0
    %119 = vmatpush1.msra.mxu0 0.0
    %120 = vmatprep.subr.mxu0 0.0
    %121 = vmatpush1.msra.mxu0 0.0
    %122 = vmatprep.subr.mxu0 0.0
    %123 = vmatpush1.msra.mxu0 0.0
    %124 = vmatprep.subr.mxu0 0.0
    %125 = vmatpush1.msra.mxu0 0.0
    %126 = vmatprep.subr.mxu0 0.0
    %127 = vmatpush1.msra.mxu0 0.0
    %128 = vmatprep.subr.mxu0 0.0
    %129 = vmatpush1.msra.mxu0 0.0
    %130 = vmatprep.subr.mxu0 0.0
    %131 = vmatpush1.msra.mxu0 0.0
    %132 = vmatprep.subr.mxu0 0.0
    %133 = vmatpush1.msra.mxu0 0.0
    %134 = vmatprep.subr.mxu0 0.0
    %135 = vmatpush1.msra.mxu0 0.0
    %136 = vmatprep.subr.mxu0 0.0
    %137 = vmatpush1.msra.mxu0 0.0
    %138 = vmatprep.subr.mxu0 0.0
    %139 = vmatpush1.msra.mxu0 0.0
    %140 = vmatprep.mubr.f32.mxu0 0.0
    %141 = vmatmul.mubr.f32.gmra.mrb[0].mxu0 %v74
    %v142 = vpop.f32.mrb[0].mxu0
    %v143 = vadd.f32 %v70, %v142
    %v144 = vpop.f32.mrb[0].mxu0
    %145 = vdwg.mxu0
    %v146 = vxor.u32 %v143, 2147483648
    %v147 = vmul.f32 %v146, 1.442695
    %v148 = vpow.pop %v147
    %v149 = vadd.f32 %v148, 1.0
    %v150 = vrcp.pop %v149
    %v151 = vmul.f32 1.0, %v150
    %v152 = vmul.f32 %v143, %v151
    %v153 = vld [vmem:[#allocation7] sm:$0xff]
    %v154 = vld [vmem:[#allocation7 + $0x8] sm:$0xff]
    %v155 = vld [vmem:[#allocation7 + $0x10] sm:$0xff]
    %v156 = vld [vmem:[#allocation7 + $0x18] sm:$0xff]
    %v157 = vld [vmem:[#allocation7 + $0x20] sm:$0xff]
    %v158 = vld [vmem:[#allocation7 + $0x28] sm:$0xff]
    %v159 = vld [vmem:[#allocation7 + $0x30] sm:$0xff]
    %v160 = vld [vmem:[#allocation7 + $0x38] sm:$0xff]
    %v161 = vld [vmem:[%s4] sm:$0x1]
    %v163 = vlaneseq
    %v164 = vshrl.u32 %v163, 7
    %v165 = vsub.s32 0, %v164
    %v166 = vrot.slane %v161, %v165
    %vm168 = vcmask 523264
    %v170 = vsel %vm168, %v152, 0
    %172 = vmatprep.subr.mxu0 0.0
    %173 = vmatpush1.msra.mxu0 %v153
    %174 = vmatprep.subr.mxu0 0.0
    %175 = vmatpush1.msra.mxu0 %v154
    %176 = vmatprep.subr.mxu0 0.0
    %177 = vmatpush1.msra.mxu0 %v155
    %178 = vmatprep.subr.mxu0 0.0
    %179 = vmatpush1.msra.mxu0 %v156
    %180 = vmatprep.subr.mxu0 0.0
    %181 = vmatpush1.msra.mxu0 %v157
    %182 = vmatprep.subr.mxu0 0.0
    %183 = vmatpush1.msra.mxu0 %v158
    %184 = vmatprep.subr.mxu0 0.0
    %185 = vmatpush1.msra.mxu0 %v159
    %186 = vmatprep.subr.mxu0 0.0
    %187 = vmatpush1.msra.mxu0 %v160
    %188 = vmatprep.subr.mxu0 0.0
    %189 = vmatpush1.msra.mxu0 0.0
    %190 = vmatprep.subr.mxu0 0.0
    %191 = vmatpush1.msra.mxu0 0.0
    %192 = vmatprep.subr.mxu0 0.0
    %193 = vmatpush1.msra.mxu0 0.0
    %194 = vmatprep.subr.mxu0 0.0
    %195 = vmatpush1.msra.mxu0 0.0
    %196 = vmatprep.subr.mxu0 0.0
    %197 = vmatpush1.msra.mxu0 0.0
    %198 = vmatprep.subr.mxu0 0.0
    %199 = vmatpush1.msra.mxu0 0.0
    %200 = vmatprep.subr.mxu0 0.0
    %201 = vmatpush1.msra.mxu0 0.0
    %202 = vmatprep.subr.mxu0 0.0
    %203 = vmatpush1.msra.mxu0 0.0
    %204 = vmatprep.subr.mxu0 0.0
    %205 = vmatpush1.msra.mxu0 0.0
    %206 = vmatprep.subr.mxu0 0.0
    %207 = vmatpush1.msra.mxu0 0.0
    %208 = vmatprep.subr.mxu0 0.0
    %209 = vmatpush1.msra.mxu0 0.0
    %210 = vmatprep.subr.mxu0 0.0
    %211 = vmatpush1.msra.mxu0 0.0
    %212 = vmatprep.subr.mxu0 0.0
    %213 = vmatpush1.msra.mxu0 0.0
    %214 = vmatprep.subr.mxu0 0.0
    %215 = vmatpush1.msra.mxu0 0.0
    %216 = vmatprep.subr.mxu0 0.0
    %217 = vmatpush1.msra.mxu0 0.0
    %218 = vmatprep.subr.mxu0 0.0
    %219 = vmatpush1.msra.mxu0 0.0
    %220 = vmatprep.subr.mxu0 0.0
    %221 = vmatpush1.msra.mxu0 0.0
    %222 = vmatprep.subr.mxu0 0.0
    %223 = vmatpush1.msra.mxu0 0.0
    %224 = vmatprep.subr.mxu0 0.0
    %225 = vmatpush1.msra.mxu0 0.0
    %226 = vmatprep.subr.mxu0 0.0
    %227 = vmatpush1.msra.mxu0 0.0
    %228 = vmatprep.subr.mxu0 0.0
    %229 = vmatpush1.msra.mxu0 0.0
    %230 = vmatprep.subr.mxu0 0.0
    %231 = vmatpush1.msra.mxu0 0.0
    %232 = vmatprep.subr.mxu0 0.0
    %233 = vmatpush1.msra.mxu0 0.0
    %234 = vmatprep.subr.mxu0 0.0
    %235 = vmatpush1.msra.mxu0 0.0
    %236 = vmatprep.mubr.f32.mxu0 0.0
    %237 = vmatmul.mubr.f32.gmra.mrb[0].mxu0 %v170
    %v238 = vpop.f32.mrb[0].mxu0
    %v239 = vadd.f32 %v166, %v238
    %v240 = vpop.f32.mrb[0].mxu0
    %241 = vdwg.mxu0
    %vm242 = vcmask 517120
    %243 = vst.msk [vmem:[#allocation8] sm:$0x3] %vm242, %v239
    // Predicated region
    $region34: #{tpu_custom_call.1} parent=1 // pred_check
      _
    $region35: #{tpu_custom_call.1} parent=1 // pred_check_branch
      %245 = sbr.rel (0) target = $region37
    $region36: #{tpu_custom_call.1} parent=1 // pred_region
      %s247 = ssub.s32 32, 32
      %248 = vsyncadd [#allocation4], %s247
      %s250 = sshll.u32 [#allocation8], 4
      %s251 = int_to_ptr.vmem [resolvable:$true] %s250
      %253 = dma.vmem_to_hbm [thread:$0]  %s251, 32, %s5, [#allocation4]
    $region37: #{tpu_custom_call.1} parent=1 // pred_fallthru
      _
    // Predicated region
    $region38: #{tpu_custom_call.1} parent=1 // pred_check
      _
    $region39: #{tpu_custom_call.1} parent=1 // pred_check_branch
      %255 = sbr.rel (0) target = $region41
    $region40: #{tpu_custom_call.1} parent=1 // pred_region
      %256 = dma.done [#allocation4], 32
    $region41: #{tpu_custom_call.1} parent=1 // pred_fallthru
      _
    %257 = vsyncpa [#allocation3], 1
    %258 = vsyncpa [#allocation6], 1
    %259 = vsyncpa [#allocation4], 1

</llo_original>
